<compile_context>
chip_gen: v7x
topology: tpu7x:2x2x1
jax: 0.10.0
libtpu: 0.0.40
codegen_flags: <defaults>
</compile_context>

<pallas_src>
import jax
import jax.numpy as jnp
from jax.experimental import pallas as pl
from jax.experimental.pallas import tpu as pltpu


def _round_up(x, m):
    return ((x + m - 1) // m) * m


def mysequential_kernel(x_ref, w1_ref, b1_ref, w2_ref, b2_ref, o_ref, h_ref):
    # block 1: nn.Linear(20, 256)  +  block 2: nn.ReLU()
    # Staged through an explicit VMEM scratch so large batch tiles do not
    # force vreg spills of the (tb, 256) intermediate.
    h = jnp.maximum(
        jnp.dot(x_ref[...], w1_ref[...], preferred_element_type=jnp.float32)
        + b1_ref[...],
        0.0,
    )
    h_ref[...] = h.astype(h_ref.dtype)
    # block 3: nn.Linear(256, d_out).  Output columns are either pre-padded to
    # a multiple of 128 lanes by the wrapper (unmasked vst) or left at d_out
    # (narrow masked store, preferred on v5e where writeback BW dominates).
    o_ref[...] = (
        jnp.dot(h_ref[...], w2_ref[...], preferred_element_type=jnp.float32)
        + b2_ref[...]
    ).astype(o_ref.dtype)


def _mysequential_forward(x, w1, b1, w2, b2, *, max_block_b, core_parallel):
    """relu(x @ w1 + b1) @ w2 + b2 fused in one pallas_call.

    w2/b2 may already be lane-padded by the caller; columns are sliced there.
    """
    B, d_in = x.shape
    H = w1.shape[1]
    n_cols = w2.shape[1]

    # Sublane alignment: 8 rows for f32 tiles, 16 for bf16 (packed).
    sub = max(8, 32 // jnp.dtype(x.dtype).itemsize)
    max_block_b = _round_up(max_block_b, sub)

    # Batch tiling.  No batch padding: grid = cdiv(B, tb).  The ragged last
    # block only ever mixes data within a row (matmul over features, bias,
    # relu), so OOB input rows are harmless and their output rows are dropped.
    if B <= max_block_b:
        tb = B  # single block; tb == full batch dim so no alignment needed
        if core_parallel and B > sub:
            # v7x: guarantee >= 2 grid steps so both TensorCores get work.
            tb = min(max_block_b, _round_up(pl.cdiv(B, 2), sub))
    else:
        tb = max_block_b
    grid = (pl.cdiv(B, tb),)

    use_core_parallel = core_parallel and grid[0] >= 2
    dim_sem = (
        (getattr(pltpu, "CORE_PARALLEL", "parallel"),)
        if use_core_parallel
        else ("parallel",)
    )

    # Advisory cost estimate so XLA can schedule around the call.
    rows = grid[0] * tb
    flops = 2 * rows * (d_in * H + H * n_cols)
    bytes_accessed = (
        x.dtype.itemsize * rows * d_in          # x
        + w1.dtype.itemsize * d_in * H          # w1
        + w2.dtype.itemsize * H * n_cols        # w2
        + 4 * (H + n_cols)                      # biases (f32)
        + 4 * rows * n_cols                     # out (f32)
    )
    cost = pl.CostEstimate(
        flops=flops, transcendentals=0, bytes_accessed=bytes_accessed
    )

    return pl.pallas_call(
        mysequential_kernel,
        out_shape=jax.ShapeDtypeStruct((B, n_cols), jnp.float32),
        grid_spec=pltpu.PrefetchScalarGridSpec(
            num_scalar_prefetch=0,
            grid=grid,
            in_specs=[
                pl.BlockSpec((tb, d_in), lambda i: (i, 0)),     # x: batch tile
                pl.BlockSpec((d_in, H), lambda i: (0, 0)),      # w1: resident
                pl.BlockSpec((1, H), lambda i: (0, 0)),         # b1: resident
                pl.BlockSpec((H, n_cols), lambda i: (0, 0)),    # w2: resident
                pl.BlockSpec((1, n_cols), lambda i: (0, 0)),    # b2: resident
            ],
            out_specs=pl.BlockSpec((tb, n_cols), lambda i: (i, 0)),
            scratch_shapes=[pltpu.VMEM((tb, H), x.dtype)],
        ),
        compiler_params=pltpu.CompilerParams(dimension_semantics=dim_sem),
        cost_estimate=cost,
    )(x, w1, b1, w2, b2)


class MySequentialPallas:
    """Pallas port of MySequential(Linear(20,256), ReLU(), Linear(256,10))."""

    def __init__(self, w1, b1, w2, b2, *, max_block_b=4096,
                 lane_dense_out=None, compute_dtype=jnp.float32,
                 core_parallel=None):
        self.d_in, self.hidden = w1.shape
        self.d_out = w2.shape[1]
        self.max_block_b = int(max_block_b)
        self.compute_dtype = jnp.dtype(compute_dtype)

        kind = ""
        try:
            kind = jax.devices()[0].device_kind.lower()
        except Exception:
            pass
        if core_parallel is None:
            # Only v7x has 2 TensorCores/chip, and only CORE_PARALLEL actually
            # splits the batch grid axis across them.
            core_parallel = ("v7" in kind) or ("7x" in kind)
        self.core_parallel = bool(core_parallel)
        if lane_dense_out is None:
            # On v5e the 10->128 lane padding multiplies output HBM writeback
            # ~12.8x; that outweighs the unmasked-store win there.
            lane_dense_out = not any(
                t in kind for t in ("v5e", "v5 lite", "v5lite")
            )
        self.lane_dense_out = bool(lane_dense_out)

        n_cols = _round_up(self.d_out, 128) if self.lane_dense_out else self.d_out
        self.n_cols = n_cols

        # Weight prep is done ONCE here (hoisted out of the per-call path):
        # cast to the compute dtype and (optionally) zero-pad W2/b2 columns to
        # a multiple of 128.  Zero pad columns cannot leak into [:, :d_out].
        cd = self.compute_dtype
        self.w1 = jnp.asarray(w1, cd)
        self.b1 = jnp.asarray(b1, jnp.float32).reshape(1, self.hidden)
        w2p = jnp.asarray(w2, cd)
        b2p = jnp.asarray(b2, jnp.float32).reshape(1, self.d_out)
        if n_cols != self.d_out:
            w2p = jnp.pad(w2p, ((0, 0), (0, n_cols - self.d_out)))
            b2p = jnp.pad(b2p, ((0, 0), (0, n_cols - self.d_out)))
        self.w2 = w2p
        self.b2 = b2p

    def __call__(self, x):
        out = _mysequential_forward(
            x.astype(self.compute_dtype), self.w1, self.b1, self.w2, self.b2,
            max_block_b=self.max_block_b, core_parallel=self.core_parallel,
        )
        return out[:, : self.d_out] if self.n_cols != self.d_out else out


def init_params(key, d_in=20, hidden=256, d_out=10):
    # Deterministic synthetic init mimicking PyTorch's U(-1/sqrt(fan_in), ...).
    k1, k2, k3, k4 = jax.random.split(key, 4)
    lim1 = 1.0 / (d_in ** 0.5)
    lim2 = 1.0 / (hidden ** 0.5)
    w1 = jax.random.uniform(k1, (d_in, hidden), jnp.float32, -lim1, lim1)
    b1 = jax.random.uniform(k2, (1, hidden), jnp.float32, -lim1, lim1)
    w2 = jax.random.uniform(k3, (hidden, d_out), jnp.float32, -lim2, lim2)
    b2 = jax.random.uniform(k4, (1, d_out), jnp.float32, -lim2, lim2)
    return w1, b1, w2, b2


if __name__ == "__main__":
    key = jax.random.PRNGKey(0)
    kx, kp = jax.random.split(key)

    # X = torch.rand(2, 20)  -> uniform [0, 1), shape (2, 20)
    x = jax.random.uniform(kx, (2, 20), jnp.float32)
    w1, b1, w2, b2 = init_params(kp)

    ref = jnp.maximum(x @ w1 + b1, 0.0) @ w2 + b2

    # Default path (auto generation gating, f32 numerics).
    net = MySequentialPallas(w1, b1, w2, b2)
    out = jax.block_until_ready(net(x))
    assert out.shape == (2, 10)
    assert jnp.allclose(out, ref, atol=1e-5, rtol=1e-5), "mismatch vs reference"

    # Ragged multi-step grid path (B not a multiple of tb, no batch padding).
    xb = jax.random.uniform(jax.random.PRNGKey(1), (1037, 20), jnp.float32)
    ref_b = jnp.maximum(xb @ w1 + b1, 0.0) @ w2 + b2
    net_small_tile = MySequentialPallas(w1, b1, w2, b2, max_block_b=512)
    out_b = jax.block_until_ready(net_small_tile(xb))
    assert out_b.shape == (1037, 10)
    assert jnp.allclose(out_b, ref_b, atol=1e-4, rtol=1e-5), "tiled mismatch"

    # Narrow (non-lane-padded) output path — the v5e-friendly variant.
    net_narrow = MySequentialPallas(w1, b1, w2, b2, lane_dense_out=False)
    out_n = jax.block_until_ready(net_narrow(x))
    assert jnp.allclose(out_n, ref, atol=1e-5, rtol=1e-5), "narrow-out mismatch"

    # bf16 MXU-operand path (v6e/v7x throughput lever); f32 accumulation,
    # so only operand-rounding error — checked with a loose tolerance.
    net_bf16 = MySequentialPallas(w1, b1, w2, b2, compute_dtype=jnp.bfloat16)
    out_h = jax.block_until_ready(net_bf16(x))
    assert jnp.allclose(out_h, ref, atol=5e-2, rtol=5e-2), "bf16 mismatch"

    print("KERNEL_OK")
</pallas_src>

<mosaic_0001>
module attributes {stable_mosaic.version = 11 : i64} {
  func.func @mysequential_kernel(%arg0: i32, %arg1: memref<2x20xf32, #tpu.memory_space<vmem>>, %arg2: memref<20x256xf32, #tpu.memory_space<vmem>>, %arg3: memref<1x256xf32, #tpu.memory_space<vmem>>, %arg4: memref<256x128xf32, #tpu.memory_space<vmem>>, %arg5: memref<1x128xf32, #tpu.memory_space<vmem>>, %arg6: memref<2x128xf32, #tpu.memory_space<vmem>>, %arg7: memref<2x256xf32, #tpu.memory_space<vmem>>) attributes {dimension_semantics = [#tpu.dimension_semantics<parallel>], iteration_bounds = array<i64: 1>, scalar_prefetch = 0 : i64, scratch_operands = 1 : i64, tpu.core_type = #tpu.core_type<tc>, window_params = [{transform_indices = @transform_0, window_bounds = array<i64: 2, 20>}, {pipeline_mode = #tpu.pipeline_mode<synchronous>, transform_indices = @transform_1, window_bounds = array<i64: 20, 256>}, {pipeline_mode = #tpu.pipeline_mode<synchronous>, transform_indices = @transform_2, window_bounds = array<i64: 1, 256>}, {pipeline_mode = #tpu.pipeline_mode<synchronous>, transform_indices = @transform_3, window_bounds = array<i64: 256, 128>}, {pipeline_mode = #tpu.pipeline_mode<synchronous>, transform_indices = @transform_4, window_bounds = array<i64: 1, 128>}, {transform_indices = @transform_5, window_bounds = array<i64: 2, 128>}]} {
    %c0 = arith.constant 0 : index
    %c0_0 = arith.constant 0 : index
    %0 = vector.load %arg1[%c0, %c0_0] : memref<2x20xf32, #tpu.memory_space<vmem>>, vector<2x20xf32>
    %c0_1 = arith.constant 0 : index
    %c0_2 = arith.constant 0 : index
    %1 = vector.load %arg2[%c0_1, %c0_2] : memref<20x256xf32, #tpu.memory_space<vmem>>, vector<20x256xf32>
    %cst = arith.constant dense<0.000000e+00> : vector<2x256xf32>
    %2 = tpu.matmul %0, %1, %cst {dimension_numbers = #tpu.dot_dimension_numbers<[1], [0], [0], [1], [0, 0, 1, 1], [], []>} : vector<2x20xf32>, vector<20x256xf32>, vector<2x256xf32> -> vector<2x256xf32>
    %c0_3 = arith.constant 0 : index
    %c0_4 = arith.constant 0 : index
    %3 = vector.load %arg3[%c0_3, %c0_4] : memref<1x256xf32, #tpu.memory_space<vmem>>, vector<1x256xf32>
    %4 = vector.broadcast %3 : vector<1x256xf32> to vector<2x256xf32>
    %5 = arith.addf %2, %4 : vector<2x256xf32>
    %cst_5 = arith.constant 0.000000e+00 : f32
    %6 = vector.broadcast %cst_5 : f32 to vector<2x256xf32>
    %7 = arith.maximumf %5, %6 : vector<2x256xf32>
    %c0_6 = arith.constant 0 : index
    %c0_7 = arith.constant 0 : index
    %8 = vector.load %arg7[%c0_6, %c0_7] : memref<2x256xf32, #tpu.memory_space<vmem>>, vector<2x256xf32>
    tpu.vector_store %arg7[%c0_6, %c0_7], %7 {strides = array<i32>} : memref<2x256xf32, #tpu.memory_space<vmem>>, vector<2x256xf32>,
    %c0_8 = arith.constant 0 : index
    %c0_9 = arith.constant 0 : index
    %9 = vector.load %arg7[%c0_8, %c0_9] : memref<2x256xf32, #tpu.memory_space<vmem>>, vector<2x256xf32>
    %c0_10 = arith.constant 0 : index
    %c0_11 = arith.constant 0 : index
    %10 = vector.load %arg4[%c0_10, %c0_11] : memref<256x128xf32, #tpu.memory_space<vmem>>, vector<256x128xf32>
    %cst_12 = arith.constant dense<0.000000e+00> : vector<2x128xf32>
    %11 = tpu.matmul %9, %10, %cst_12 {dimension_numbers = #tpu.dot_dimension_numbers<[1], [0], [0], [1], [0, 0, 1, 1], [], []>} : vector<2x256xf32>, vector<256x128xf32>, vector<2x128xf32> -> vector<2x128xf32>
    %c0_13 = arith.constant 0 : index
    %c0_14 = arith.constant 0 : index
    %12 = vector.load %arg5[%c0_13, %c0_14] : memref<1x128xf32, #tpu.memory_space<vmem>>, vector<1x128xf32>
    %13 = vector.broadcast %12 : vector<1x128xf32> to vector<2x128xf32>
    %14 = arith.addf %11, %13 : vector<2x128xf32>
    %c0_15 = arith.constant 0 : index
    %c0_16 = arith.constant 0 : index
    %15 = vector.load %arg6[%c0_15, %c0_16] : memref<2x128xf32, #tpu.memory_space<vmem>>, vector<2x128xf32>
    tpu.vector_store %arg6[%c0_15, %c0_16], %14 {strides = array<i32>} : memref<2x128xf32, #tpu.memory_space<vmem>>, vector<2x128xf32>,
    return
  }
  func.func @transform_0(%arg0: i32) -> (i32, i32) {
    %c0_i32 = arith.constant 0 : i32
    %c0_i32_0 = arith.constant 0 : i32
    return %arg0, %c0_i32 : i32, i32
  }
  func.func @transform_1(%arg0: i32) -> (i32, i32) {
    %c0_i32 = arith.constant 0 : i32
    %c0_i32_0 = arith.constant 0 : i32
    %c0_i32_1 = arith.constant 0 : i32
    return %c0_i32, %c0_i32_0 : i32, i32
  }
  func.func @transform_2(%arg0: i32) -> (i32, i32) {
    %c0_i32 = arith.constant 0 : i32
    %c0_i32_0 = arith.constant 0 : i32
    %c0_i32_1 = arith.constant 0 : i32
    return %c0_i32, %c0_i32_0 : i32, i32
  }
  func.func @transform_3(%arg0: i32) -> (i32, i32) {
    %c0_i32 = arith.constant 0 : i32
    %c0_i32_0 = arith.constant 0 : i32
    %c0_i32_1 = arith.constant 0 : i32
    return %c0_i32, %c0_i32_0 : i32, i32
  }
  func.func @transform_4(%arg0: i32) -> (i32, i32) {
    %c0_i32 = arith.constant 0 : i32
    %c0_i32_0 = arith.constant 0 : i32
    %c0_i32_1 = arith.constant 0 : i32
    return %c0_i32, %c0_i32_0 : i32, i32
  }
  func.func @transform_5(%arg0: i32) -> (i32, i32) {
    %c0_i32 = arith.constant 0 : i32
    %c0_i32_0 = arith.constant 0 : i32
    return %arg0, %c0_i32 : i32, i32
  }
}

</mosaic_0001>

<llo_original>
// kernel: tpu_custom_call.1
$region0: #{tpu_custom_call.1}
  #allocation0 [shape = 'u32[]', space=smem, size = 0x4, offset = 0x4, fixed_abs, tag = 'smem constant byte address 0x4 - core index']
  #allocation1 [shape = 'u32[144,128]{1,0:T(1,128)}', space=vmem, size = 0x12000, scoped, tag = 'internal scratch']
  #allocation2 [shape = 'f32[2,256]{1,0:T(2,128)}', space=vmem, size = 0x800, scoped, tag = 'scratch operand']
  %s0 = inlined_call_operand.hbm [shape: f32[2,20], index: 0, kind: input, shape index: {}]
  %s1 = inlined_call_operand.hbm [shape: f32[20,256], index: 1, kind: input, shape index: {}]
  %s2 = inlined_call_operand.vmem [shape: f32[1,256], index: 2, kind: input, shape index: {}]
  %s3 = inlined_call_operand.hbm [shape: f32[256,128], index: 3, kind: input, shape index: {}]
  %s4 = inlined_call_operand.vmem [shape: f32[1,128], index: 4, kind: input, shape index: {}]
  %s5 = inlined_call_operand.hbm [shape: f32[2,128], index: 5, kind: output, shape index: {}]
  %s6 = sld [smem:[#allocation0]]
  $region42: #{tpu_custom_call.1} parent=0
    _
  %s8 = ssub.s32 1, %s6
  %s9 = scalar_select 0, %s8, %s6
  $region1: #{tpu_custom_call.1} parent=0
    #allocation3 [shape = 'u8[1024]{0}', space=vmem, size = 0x400, scoped, tag = 'input window, operand 0, single buffered']
    #allocation4 [shape = 's32[1]{0}', space=sflag, size = 0x4, scoped, tag = 'scoped memory for tpu_custom_call.1']
    #allocation5 [shape = 's32[1]{0}', space=sflag, size = 0x4, scoped, tag = 'scoped memory for tpu_custom_call.1']
    #allocation6 [shape = 'u8[24576]{0}', space=vmem, size = 0x6000, scoped, tag = 'input window, operand 1, single buffered']
    #allocation7 [shape = 's32[1]{0}', space=sflag, size = 0x4, scoped, tag = 'scoped memory for tpu_custom_call.1']
    #allocation8 [shape = 'u8[131072]{0}', space=vmem, size = 0x20000, scoped, tag = 'input window, operand 3, single buffered']
    #allocation9 [shape = 'u8[1024]{0}', space=vmem, size = 0x400, scoped, tag = 'output window, operand 0, single buffered']
    %10 = vsyncpa [#allocation4], 0
    %11 = vsyncpa [#allocation7], 0
    %12 = vsyncpa [#allocation5], 0
    // Predicated region
    $region2: #{tpu_custom_call.1} parent=1 // pred_check
      _
    $region3: #{tpu_custom_call.1} parent=1 // pred_check_branch
      %14 = sbr.rel (0) target = $region5
    $region4: #{tpu_custom_call.1} parent=1 // pred_region
      %s16 = ssub.s32 32, 32
      %17 = vsyncadd [#allocation4], %s16
      %s19 = sshll.u32 [#allocation3], 4
      %s20 = int_to_ptr.vmem [resolvable:$true] %s19
      %22 = dma.hbm_to_vmem [thread:$0]  %s0, 32, %s20, [#allocation4]
    $region5: #{tpu_custom_call.1} parent=1 // pred_fallthru
      _
    // Predicated region
    $region6: #{tpu_custom_call.1} parent=1 // pred_check
      _
    $region7: #{tpu_custom_call.1} parent=1 // pred_check_branch
      %24 = sbr.rel (0) target = $region9
    $region8: #{tpu_custom_call.1} parent=1 // pred_region
      %s26 = ssub.s32 768, 768
      %27 = vsyncadd [#allocation7], %s26
      %s28 = sshll.u32 [#allocation6], 4
      %s29 = int_to_ptr.vmem [resolvable:$true] %s28
      %34 = dma.hbm_to_vmem [thread:$0]  %s1, 768, %s29, [#allocation7], 256, 256, 16
    $region9: #{tpu_custom_call.1} parent=1 // pred_fallthru
      _
    // Predicated region
    $region10: #{tpu_custom_call.1} parent=1 // pred_check
      _
    $region11: #{tpu_custom_call.1} parent=1 // pred_check_branch
      %36 = sbr.rel (0) target = $region13
    $region12: #{tpu_custom_call.1} parent=1 // pred_region
      _
    $region13: #{tpu_custom_call.1} parent=1 // pred_fallthru
      _
    // Predicated region
    $region14: #{tpu_custom_call.1} parent=1 // pred_check
      _
    $region15: #{tpu_custom_call.1} parent=1 // pred_check_branch
      %38 = sbr.rel (0) target = $region17
    $region16: #{tpu_custom_call.1} parent=1 // pred_region
      %s40 = ssub.s32 4096, 4096
      %41 = vsyncadd [#allocation7], %s40
      %s42 = sshll.u32 [#allocation8], 4
      %s43 = int_to_ptr.vmem [resolvable:$true] %s42
      %48 = dma.hbm_to_vmem [thread:$0]  %s3, 4096, %s43, [#allocation7], 128, 128, 8
    $region17: #{tpu_custom_call.1} parent=1 // pred_fallthru
      _
    // Predicated region
    $region18: #{tpu_custom_call.1} parent=1 // pred_check
      _
    $region19: #{tpu_custom_call.1} parent=1 // pred_check_branch
      %50 = sbr.rel (0) target = $region21
    $region20: #{tpu_custom_call.1} parent=1 // pred_region
      _
    $region21: #{tpu_custom_call.1} parent=1 // pred_fallthru
      _
    // Predicated region
    $region22: #{tpu_custom_call.1} parent=1 // pred_check
      _
    $region23: #{tpu_custom_call.1} parent=1 // pred_check_branch
      %52 = sbr.rel (0) target = $region25
    $region24: #{tpu_custom_call.1} parent=1 // pred_region
      %53 = dma.done [#allocation4], 32
    $region25: #{tpu_custom_call.1} parent=1 // pred_fallthru
      _
    // Predicated region
    $region26: #{tpu_custom_call.1} parent=1 // pred_check
      _
    $region27: #{tpu_custom_call.1} parent=1 // pred_check_branch
      %55 = sbr.rel (0) target = $region29
    $region28: #{tpu_custom_call.1} parent=1 // pred_region
      %56 = dma.done [#allocation7], 768
    $region29: #{tpu_custom_call.1} parent=1 // pred_fallthru
      _
    // Predicated region
    $region30: #{tpu_custom_call.1} parent=1 // pred_check
      _
    $region31: #{tpu_custom_call.1} parent=1 // pred_check_branch
      %58 = sbr.rel (0) target = $region33
    $region32: #{tpu_custom_call.1} parent=1 // pred_region
      %59 = dma.done [#allocation7], 4096
    $region33: #{tpu_custom_call.1} parent=1 // pred_fallthru
      _
    %v60 = vld [vmem:[#allocation3] sm:$0x3]
    %v61 = vld [vmem:[#allocation6] sm:$0xff]
    %v62 = vld [vmem:[#allocation6 + $0x8] sm:$0xff]
    %v63 = vld [vmem:[#allocation6 + $0x10] sm:$0xff]
    %v64 = vld [vmem:[#allocation6 + $0x18] sm:$0xff]
    %v65 = vld [vmem:[#allocation6 + $0x20] sm:$0xf]
    %v66 = vld [vmem:[#allocation6 + $0x28] sm:$0xf]
    %v67 = vld [vmem:[%s2] sm:$0x3]
    %v69 = vlaneseq
    %v70 = vshrl.u32 %v69, 7
    %v71 = vsub.s32 0, %v70
    %v72 = vrot.slane %v67, %v71
    %v73 = vlaneseq
    %v74 = vshrl.u32 %v73, 7
    %v75 = vsub.s32 1, %v74
    %v76 = vrot.slane %v67, %v75
    %vm79 = vcmask 162816
    %v81 = vsel %vm79, %v60, 0
    %vm83 = vcmask 1043456
    %v85 = vsel %vm83, %v65, 0
    %v88 = vsel %vm83, %v66, 0
    %90 = vmatprep.subr.mxu0 %v62
    %91 = vmatpush1.msra.mxu0 %v61
    %92 = vmatprep.subr.mxu0 %v64
    %93 = vmatpush1.msra.mxu0 %v63
    %94 = vmatprep.subr.mxu0 %v88
    %95 = vmatpush1.msra.mxu0 %v85
    %96 = vmatprep.subr.mxu0 0.0
    %97 = vmatpush1.msra.mxu0 0.0
    %98 = vmatprep.subr.mxu0 0.0
    %99 = vmatpush1.msra.mxu0 0.0
    %100 = vmatprep.subr.mxu0 0.0
    %101 = vmatpush1.msra.mxu0 0.0
    %102 = vmatprep.subr.mxu0 0.0
    %103 = vmatpush1.msra.mxu0 0.0
    %104 = vmatprep.subr.mxu0 0.0
    %105 = vmatpush1.msra.mxu0 0.0
    %106 = vmatprep.subr.mxu0 0.0
    %107 = vmatpush1.msra.mxu0 0.0
    %108 = vmatprep.subr.mxu0 0.0
    %109 = vmatpush1.msra.mxu0 0.0
    %110 = vmatprep.subr.mxu0 0.0
    %111 = vmatpush1.msra.mxu0 0.0
    %112 = vmatprep.subr.mxu0 0.0
    %113 = vmatpush1.msra.mxu0 0.0
    %114 = vmatprep.subr.mxu0 0.0
    %115 = vmatpush1.msra.mxu0 0.0
    %116 = vmatprep.subr.mxu0 0.0
    %117 = vmatpush1.msra.mxu0 0.0
    %118 = vmatprep.subr.mxu0 0.0
    %119 = vmatpush1.msra.mxu0 0.0
    %120 = vmatprep.subr.mxu0 0.0
    %121 = vmatpush1.msra.mxu0 0.0
    %122 = vmatprep.subr.mxu0 0.0
    %123 = vmatpush1.msra.mxu0 0.0
    %124 = vmatprep.subr.mxu0 0.0
    %125 = vmatpush1.msra.mxu0 0.0
    %126 = vmatprep.subr.mxu0 0.0
    %127 = vmatpush1.msra.mxu0 0.0
    %128 = vmatprep.subr.mxu0 0.0
    %129 = vmatpush1.msra.mxu0 0.0
    %130 = vmatprep.subr.mxu0 0.0
    %131 = vmatpush1.msra.mxu0 0.0
    %132 = vmatprep.subr.mxu0 0.0
    %133 = vmatpush1.msra.mxu0 0.0
    %134 = vmatprep.subr.mxu0 0.0
    %135 = vmatpush1.msra.mxu0 0.0
    %136 = vmatprep.subr.mxu0 0.0
    %137 = vmatpush1.msra.mxu0 0.0
    %138 = vmatprep.subr.mxu0 0.0
    %139 = vmatpush1.msra.mxu0 0.0
    %140 = vmatprep.subr.mxu0 0.0
    %141 = vmatpush1.msra.mxu0 0.0
    %142 = vmatprep.subr.mxu0 0.0
    %143 = vmatpush1.msra.mxu0 0.0
    %144 = vmatprep.subr.mxu0 0.0
    %145 = vmatpush1.msra.mxu0 0.0
    %146 = vmatprep.subr.mxu0 0.0
    %147 = vmatpush1.msra.mxu0 0.0
    %148 = vmatprep.subr.mxu0 0.0
    %149 = vmatpush1.msra.mxu0 0.0
    %150 = vmatprep.subr.mxu0 0.0
    %151 = vmatpush1.msra.mxu0 0.0
    %152 = vmatprep.subr.mxu0 0.0
    %153 = vmatpush1.msra.mxu0 0.0
    %154 = vmatprep.mubr.f32.mxu0 0.0
    %155 = vmatmul.mubr.f32.gmra.mrb[0].mxu0 %v81
    %v156 = vpop.f32.mrb[0].mxu0
    %v157 = vadd.f32 %v72, %v156
    %v158 = vpop.f32.mrb[0].mxu0
    %v159 = vadd.f32 %v76, %v158
    %160 = vdwg.mxu0
    %v161 = vmax.f32 %v157, 0.0
    %v162 = vmax.f32 %v159, 0.0
    %v165 = vcombine.low %v161, %v162
    %v167 = vunpack.c.l.s4 1983009808
    %v168 = vunpack.c.0.s8 %v167
    %v169 = vlaneseq
    %v170 = vshrl.u32 %v169, 7
    %v171 = vsub.s32 %v168, %v170
    %v172 = vrot.slane %v165, %v171
    %174 = vst [vmem:[#allocation2] sm:$0xf] %v172
    %v175 = vld [vmem:[#allocation2] sm:$0xf]
    %v176 = vld [vmem:[#allocation8] sm:$0xff]
    %v177 = vld [vmem:[#allocation8 + $0x8] sm:$0xff]
    %v178 = vld [vmem:[#allocation8 + $0x10] sm:$0xff]
    %v179 = vld [vmem:[#allocation8 + $0x18] sm:$0xff]
    %v180 = vld [vmem:[#allocation8 + $0x20] sm:$0xff]
    %v181 = vld [vmem:[#allocation8 + $0x28] sm:$0xff]
    %v182 = vld [vmem:[#allocation8 + $0x30] sm:$0xff]
    %v183 = vld [vmem:[#allocation8 + $0x38] sm:$0xff]
    %v184 = vld [vmem:[#allocation8 + $0x40] sm:$0xff]
    %v185 = vld [vmem:[#allocation8 + $0x48] sm:$0xff]
    %v186 = vld [vmem:[#allocation8 + $0x50] sm:$0xff]
    %v187 = vld [vmem:[#allocation8 + $0x58] sm:$0xff]
    %v188 = vld [vmem:[#allocation8 + $0x60] sm:$0xff]
    %v189 = vld [vmem:[#allocation8 + $0x68] sm:$0xff]
    %v190 = vld [vmem:[#allocation8 + $0x70] sm:$0xff]
    %v191 = vld [vmem:[#allocation8 + $0x78] sm:$0xff]
    %v192 = vld [vmem:[#allocation8 + $0x80] sm:$0xff]
    %v193 = vld [vmem:[#allocation8 + $0x88] sm:$0xff]
    %v194 = vld [vmem:[#allocation8 + $0x90] sm:$0xff]
    %v195 = vld [vmem:[#allocation8 + $0x98] sm:$0xff]
    %v196 = vld [vmem:[#allocation8 + $0xa0] sm:$0xff]
    %v197 = vld [vmem:[#allocation8 + $0xa8] sm:$0xff]
    %v198 = vld [vmem:[#allocation8 + $0xb0] sm:$0xff]
    %v199 = vld [vmem:[#allocation8 + $0xb8] sm:$0xff]
    %v200 = vld [vmem:[#allocation8 + $0xc0] sm:$0xff]
    %v201 = vld [vmem:[#allocation8 + $0xc8] sm:$0xff]
    %v202 = vld [vmem:[#allocation8 + $0xd0] sm:$0xff]
    %v203 = vld [vmem:[#allocation8 + $0xd8] sm:$0xff]
    %v204 = vld [vmem:[#allocation8 + $0xe0] sm:$0xff]
    %v205 = vld [vmem:[#allocation8 + $0xe8] sm:$0xff]
    %v206 = vld [vmem:[#allocation8 + $0xf0] sm:$0xff]
    %v207 = vld [vmem:[#allocation8 + $0xf8] sm:$0xff]
    %v208 = vld [vmem:[%s4] sm:$0x1]
    %v210 = vlaneseq
    %v211 = vshrl.u32 %v210, 7
    %v212 = vsub.s32 0, %v211
    %v213 = vrot.slane %v208, %v212
    %v217 = vunpack.c.l.s4 1983009808
    %v218 = vunpack.c.0.s8 %v217
    %v219 = vlaneseq
    %v220 = vshrl.u32 %v219, 7
    %v221 = vsub.s32 %v218, %v220
    %v222 = vrot.slane %v175, %v221
    %v223 = vcombine.high %v222, %v222
    %226 = vmatprep.subr.mxu0 0.0
    %227 = vmatpush1.msra.mxu0 %v176
    %228 = vmatprep.subr.mxu0 0.0
    %229 = vmatpush1.msra.mxu0 %v177
    %230 = vmatprep.subr.mxu0 0.0
    %231 = vmatpush1.msra.mxu0 %v178
    %232 = vmatprep.subr.mxu0 0.0
    %233 = vmatpush1.msra.mxu0 %v179
    %234 = vmatprep.subr.mxu0 0.0
    %235 = vmatpush1.msra.mxu0 %v180
    %236 = vmatprep.subr.mxu0 0.0
    %237 = vmatpush1.msra.mxu0 %v181
    %238 = vmatprep.subr.mxu0 0.0
    %239 = vmatpush1.msra.mxu0 %v182
    %240 = vmatprep.subr.mxu0 0.0
    %241 = vmatpush1.msra.mxu0 %v183
    %242 = vmatprep.subr.mxu0 0.0
    %243 = vmatpush1.msra.mxu0 %v184
    %244 = vmatprep.subr.mxu0 0.0
    %245 = vmatpush1.msra.mxu0 %v185
    %246 = vmatprep.subr.mxu0 0.0
    %247 = vmatpush1.msra.mxu0 %v186
    %248 = vmatprep.subr.mxu0 0.0
    %249 = vmatpush1.msra.mxu0 %v187
    %250 = vmatprep.subr.mxu0 0.0
    %251 = vmatpush1.msra.mxu0 %v188
    %252 = vmatprep.subr.mxu0 0.0
    %253 = vmatpush1.msra.mxu0 %v189
    %254 = vmatprep.subr.mxu0 0.0
    %255 = vmatpush1.msra.mxu0 %v190
    %256 = vmatprep.subr.mxu0 0.0
    %257 = vmatpush1.msra.mxu0 %v191
    %258 = vmatprep.subr.mxu0 0.0
    %259 = vmatpush1.msra.mxu0 %v192
    %260 = vmatprep.subr.mxu0 0.0
    %261 = vmatpush1.msra.mxu0 %v193
    %262 = vmatprep.subr.mxu0 0.0
    %263 = vmatpush1.msra.mxu0 %v194
    %264 = vmatprep.subr.mxu0 0.0
    %265 = vmatpush1.msra.mxu0 %v195
    %266 = vmatprep.subr.mxu0 0.0
    %267 = vmatpush1.msra.mxu0 %v196
    %268 = vmatprep.subr.mxu0 0.0
    %269 = vmatpush1.msra.mxu0 %v197
    %270 = vmatprep.subr.mxu0 0.0
    %271 = vmatpush1.msra.mxu0 %v198
    %272 = vmatprep.subr.mxu0 0.0
    %273 = vmatpush1.msra.mxu0 %v199
    %274 = vmatprep.subr.mxu0 0.0
    %275 = vmatpush1.msra.mxu0 %v200
    %276 = vmatprep.subr.mxu0 0.0
    %277 = vmatpush1.msra.mxu0 %v201
    %278 = vmatprep.subr.mxu0 0.0
    %279 = vmatpush1.msra.mxu0 %v202
    %280 = vmatprep.subr.mxu0 0.0
    %281 = vmatpush1.msra.mxu0 %v203
    %282 = vmatprep.subr.mxu0 0.0
    %283 = vmatpush1.msra.mxu0 %v204
    %284 = vmatprep.subr.mxu0 0.0
    %285 = vmatpush1.msra.mxu0 %v205
    %286 = vmatprep.subr.mxu0 0.0
    %287 = vmatpush1.msra.mxu0 %v206
    %288 = vmatprep.subr.mxu0 0.0
    %289 = vmatpush1.msra.mxu0 %v207
    %290 = vmatprep.mubr.f32.mxu0 %v223
    %291 = vmatmul.mubr.f32.gmra.mrb[0].mxu0 %v222
    %v292 = vpop.f32.mrb[0].mxu0
    %v293 = vadd.f32 %v213, %v292
    %v294 = vpop.f32.mrb[0].mxu0
    %295 = vdwg.mxu0
    %296 = vst [vmem:[#allocation9] sm:$0x3] %v293
    // Predicated region
    $region34: #{tpu_custom_call.1} parent=1 // pred_check
      _
    $region35: #{tpu_custom_call.1} parent=1 // pred_check_branch
      %298 = sbr.rel (0) target = $region37
    $region36: #{tpu_custom_call.1} parent=1 // pred_region
      %s300 = ssub.s32 32, 32
      %301 = vsyncadd [#allocation5], %s300
      %s303 = sshll.u32 [#allocation9], 4
      %s304 = int_to_ptr.vmem [resolvable:$true] %s303
      %306 = dma.vmem_to_hbm [thread:$0]  %s304, 32, %s5, [#allocation5]
    $region37: #{tpu_custom_call.1} parent=1 // pred_fallthru
      _
    // Predicated region
    $region38: #{tpu_custom_call.1} parent=1 // pred_check
      _
    $region39: #{tpu_custom_call.1} parent=1 // pred_check_branch
      %308 = sbr.rel (0) target = $region41
    $region40: #{tpu_custom_call.1} parent=1 // pred_region
      %309 = dma.done [#allocation5], 32
    $region41: #{tpu_custom_call.1} parent=1 // pred_fallthru
      _
    %310 = vsyncpa [#allocation4], 1
    %311 = vsyncpa [#allocation7], 1
    %312 = vsyncpa [#allocation5], 1

</llo_original>
